<compile_context>
chip_gen: v7x
topology: tpu7x:2x2x1
jax: 0.10.0
libtpu: 0.0.40
codegen_flags: <defaults>
</compile_context>

<pallas_src>
import jax
import jax.numpy as jnp
from jax.experimental import pallas as pl
from jax.experimental.pallas import tpu as pltpu

_LANE = 128          # TPU lane width
_BIG = 1e30          # finite sentinel (NOT inf: avoids 0*inf NaN in the slope mul)


def lag_encoder_kernel(x_ref, tbl_ref, out_ref):
    # x_ref:   [C, TB]        batch on the 128-lane axis, original input dtype
    # tbl_ref: [4, C*dof, 1]  stacked f32 (e_prev, e_next, s_left, s_right)
    # out_ref: [C*dof, TB]    (C, dof) collapsed onto the sublane axis
    C, TB = x_ref.shape
    CD = out_ref.shape[0]
    dof = CD // C

    x = x_ref[...].astype(jnp.float32)                                    # [C, TB]
    # Sublane-broadcast each component row across its dof hats; with dof a
    # sublane multiple this reshape only relabels tiles (layout no-op).
    xb = jnp.broadcast_to(x[:, None, :], (C, dof, TB)).reshape(CD, TB)    # [CD, TB]

    tbl = tbl_ref[...]                                                    # [4, CD, 1]
    e_prev, e_next, s_left, s_right = tbl[0], tbl[1], tbl[2], tbl[3]      # each [CD, 1]

    # left[j]  = (x - e_{j-1}) / (e_j - e_{j-1})   rising edge of hat j
    # right[j] = (e_{j+1} - x) / (e_{j+1} - e_j)   falling edge of hat j
    # Sentinel rows (j=0 for left, j=dof-1 for right) evaluate to ~1e30, so min()
    # picks the other branch there -- identical to the reference
    # concat([right[0], min(left, right), left[-1]]).
    left = s_left * jnp.maximum(xb - e_prev, 0.0)                         # [CD, TB]
    right = s_right * jnp.maximum(e_next - xb, 0.0)                       # [CD, TB]
    out_ref[...] = jnp.minimum(left, right).astype(out_ref.dtype)


def _build_tables(bin_edges):
    """[C, dof] monotone bin edges -> stacked [4, C*dof, 1] edge/slope tables."""
    be = bin_edges.astype(jnp.float32)
    C, dof = be.shape
    inv_w = 1.0 / (be[:, 1:] - be[:, :-1])                                   # [C, dof-1]
    e_prev = jnp.concatenate([jnp.full_like(be[:, :1], -_BIG), be[:, :-1]], axis=1)
    e_next = jnp.concatenate([be[:, 1:], jnp.full_like(be[:, :1], _BIG)], axis=1)
    s_left = jnp.concatenate([jnp.ones_like(be[:, :1]), inv_w], axis=1)
    s_right = jnp.concatenate([inv_w, jnp.ones_like(be[:, :1])], axis=1)
    tbl = jnp.stack([e_prev, e_next, s_left, s_right], axis=0)               # [4, C, dof]
    return tbl.reshape(4, C * dof, 1)


def _tpu_generation_params():
    """(batch-tile lane cap, TensorCores per chip) by TPU generation."""
    cap, n_cores = 16384, 1          # v5e / v6e: 1 TC per chip
    try:
        kind = jax.devices()[0].device_kind.lower()
        if "v7" in kind or "7x" in kind:
            cap, n_cores = 32768, 2  # 3.2 TB/s HBM wants bigger steps; 2 TCs/chip
    except Exception:
        pass
    return cap, n_cores


def _select_batch_tile(B, cap, n_cores):
    """Step-count-first tile selection: big tiles, < one lane-group padding/tile."""
    n_tiles = max(1, pl.cdiv(B, cap))
    if n_cores > 1 and B > _LANE:
        n_tiles = max(2, n_tiles + (n_tiles & 1))     # even, >=2 for megacore balance
    tb = pl.cdiv(pl.cdiv(B, n_tiles), _LANE) * _LANE
    return tb, pl.cdiv(B, tb)


def lag_encoder_forward(x, bin_edges, *, tb=None, out_dtype=None,
                        x_layout="bc", out_layout="bcd"):
    """LagEncoder.forward.

    x:          [B, C] if x_layout="bc" (PyTorch), or [C, B] if x_layout="cb".
    bin_edges:  [C, dof].
    Returns [B, C, dof] if out_layout="bcd" (PyTorch), or the lane-dense
    [C, dof, B] if out_layout="cdb" (fast path: skips the wrapper transpose).
    out_dtype=jnp.bfloat16 halves output write traffic (compute stays f32).
    """
    if x_layout == "bc":
        B, C = x.shape
        x_t = jnp.swapaxes(x, 0, 1)        # [C, B]; keep original dtype through DMA
    elif x_layout == "cb":
        C, B = x.shape
        x_t = x
    else:
        raise ValueError(f"unknown x_layout {x_layout!r}")
    C2, dof = bin_edges.shape
    assert C == C2
    CD = C * dof
    out_dtype = x.dtype if out_dtype is None else jnp.dtype(out_dtype)

    cap, n_cores = _tpu_generation_params()
    if tb is None:
        tb, n_tiles = _select_batch_tile(B, cap, n_cores)
    else:
        tb = pl.cdiv(tb, _LANE) * _LANE
        n_tiles = pl.cdiv(B, tb)
    b_pad = n_tiles * tb

    if b_pad != B:
        x_t = jnp.pad(x_t, ((0, 0), (0, b_pad - B)))      # [C, b_pad]
    tables = _build_tables(bin_edges)                      # [4, CD, 1] f32

    bytes_accessed = (C * b_pad * x_t.dtype.itemsize
                      + CD * b_pad * jnp.dtype(out_dtype).itemsize
                      + 4 * CD * 4)
    out_t = pl.pallas_call(
        lag_encoder_kernel,
        out_shape=jax.ShapeDtypeStruct((CD, b_pad), out_dtype),
        grid=(n_tiles,),
        in_specs=[
            pl.BlockSpec((C, tb), lambda i: (0, i)),          # x tile: batch on lanes
            pl.BlockSpec((4, CD, 1), lambda i: (0, 0, 0)),    # grid-invariant tables
        ],
        out_specs=pl.BlockSpec((CD, tb), lambda i: (0, i)),   # one dense 2-D slab
        compiler_params=pltpu.CompilerParams(
            dimension_semantics=("parallel",),
        ),
        cost_estimate=pl.CostEstimate(
            flops=7 * CD * b_pad, transcendentals=0, bytes_accessed=bytes_accessed),
    )(x_t, tables)

    if out_layout == "cdb":
        out = out_t.reshape(C, dof, b_pad)
        return out if b_pad == B else out[..., :B]
    elif out_layout == "bcd":
        # PyTorch layout.  NOTE: this relayout is an extra HBM read+write pass
        # over the largest array -- prefer out_layout="cdb" when the consumer
        # can take the feature-major layout.
        return jnp.transpose(out_t.reshape(C, dof, b_pad), (2, 0, 1))[:B]
    else:
        raise ValueError(f"unknown out_layout {out_layout!r}")


def lag_encoder_reference(x, bin_edges):
    """Direct transliteration of the PyTorch forward, in plain JAX (for checking)."""
    offset = x[:, :, None] - bin_edges[None, :, :]
    scale = 1.0 / (bin_edges[None, :, 1:] - bin_edges[None, :, :-1])
    left_x = scale * jnp.maximum(offset[:, :, :-1], 0.0)
    right_x = scale * jnp.maximum(-offset[:, :, 1:], 0.0)
    return jnp.concatenate(
        [right_x[:, :, :1],
         jnp.minimum(left_x[:, :, :-1], right_x[:, :, 1:]),
         left_x[:, :, -1:]], axis=2)


if __name__ == "__main__":
    B, n_components, dof = 16, 4, 8

    # Deterministic "buffer" init, matching the module's __init__:
    # bin_edges = linspace(-1, 1, dof) repeated over n_components.
    bin_edges = jnp.tile(jnp.linspace(-1.0, 1.0, dof, dtype=jnp.float32)[None, :],
                         (n_components, 1))

    key = jax.random.PRNGKey(0)
    x = jax.random.uniform(key, (B, n_components), dtype=jnp.float32,
                           minval=-1.2, maxval=1.2)

    ref = lag_encoder_reference(x, bin_edges)

    # Default path: PyTorch [B, C, dof] layout.
    out = jax.block_until_ready(lag_encoder_forward(x, bin_edges))
    assert out.shape == (B, n_components, dof)
    assert jnp.allclose(out, ref, atol=1e-5, rtol=1e-5)

    # Fast path: lane-dense [C, dof, B] output, no wrapper transpose.
    out_cdb = jax.block_until_ready(
        lag_encoder_forward(x, bin_edges, out_layout="cdb"))
    assert out_cdb.shape == (n_components, dof, B)
    assert jnp.allclose(jnp.transpose(out_cdb, (2, 0, 1)), ref, atol=1e-5, rtol=1e-5)

    print("KERNEL_OK")
</pallas_src>

<mosaic_0001>
module attributes {stable_mosaic.version = 11 : i64} {
  func.func @lag_encoder_kernel(%arg0: i32, %arg1: memref<4x128xf32, #tpu.memory_space<vmem>>, %arg2: memref<4x32x1xf32, #tpu.memory_space<vmem>>, %arg3: memref<32x128xf32, #tpu.memory_space<vmem>>) attributes {dimension_semantics = [#tpu.dimension_semantics<parallel>], iteration_bounds = array<i64: 1>, scalar_prefetch = 0 : i64, scratch_operands = 0 : i64, tpu.core_type = #tpu.core_type<tc>, window_params = [{transform_indices = @transform_0, window_bounds = array<i64: 4, 128>}, {pipeline_mode = #tpu.pipeline_mode<synchronous>, transform_indices = @transform_1, window_bounds = array<i64: 4, 32, 1>}, {transform_indices = @transform_2, window_bounds = array<i64: 32, 128>}]} {
    %c0 = arith.constant 0 : index
    %c0_0 = arith.constant 0 : index
    %0 = vector.load %arg1[%c0, %c0_0] : memref<4x128xf32, #tpu.memory_space<vmem>>, vector<4x128xf32>
    %1 = vector.shape_cast %0 : vector<4x128xf32> to vector<4x1x128xf32>
    %2 = vector.shape_cast %1 : vector<4x1x128xf32> to vector<4x1x128xf32>
    %3 = vector.broadcast %2 : vector<4x1x128xf32> to vector<4x8x128xf32>
    %4 = vector.shape_cast %3 : vector<4x8x128xf32> to vector<32x128xf32>
    %c0_1 = arith.constant 0 : index
    %c0_2 = arith.constant 0 : index
    %c0_3 = arith.constant 0 : index
    %5 = vector.load %arg2[%c0_1, %c0_2, %c0_3] : memref<4x32x1xf32, #tpu.memory_space<vmem>>, vector<4x32x1xf32>
    %6 = vector.extract_strided_slice %5 {offsets = [0, 0, 0], sizes = [1, 32, 1], strides = [1, 1, 1]} : vector<4x32x1xf32> to vector<1x32x1xf32>
    %7 = vector.shape_cast %6 : vector<1x32x1xf32> to vector<32x1xf32>
    %8 = vector.extract_strided_slice %5 {offsets = [1, 0, 0], sizes = [1, 32, 1], strides = [1, 1, 1]} : vector<4x32x1xf32> to vector<1x32x1xf32>
    %9 = vector.shape_cast %8 : vector<1x32x1xf32> to vector<32x1xf32>
    %10 = vector.extract_strided_slice %5 {offsets = [2, 0, 0], sizes = [1, 32, 1], strides = [1, 1, 1]} : vector<4x32x1xf32> to vector<1x32x1xf32>
    %11 = vector.shape_cast %10 : vector<1x32x1xf32> to vector<32x1xf32>
    %12 = vector.extract_strided_slice %5 {offsets = [3, 0, 0], sizes = [1, 32, 1], strides = [1, 1, 1]} : vector<4x32x1xf32> to vector<1x32x1xf32>
    %13 = vector.shape_cast %12 : vector<1x32x1xf32> to vector<32x1xf32>
    %14 = vector.broadcast %7 : vector<32x1xf32> to vector<32x128xf32>
    %15 = arith.subf %4, %14 : vector<32x128xf32>
    %cst = arith.constant 0.000000e+00 : f32
    %16 = vector.broadcast %cst : f32 to vector<32x128xf32>
    %17 = arith.maximumf %15, %16 : vector<32x128xf32>
    %18 = vector.broadcast %11 : vector<32x1xf32> to vector<32x128xf32>
    %19 = arith.mulf %18, %17 : vector<32x128xf32>
    %20 = vector.broadcast %9 : vector<32x1xf32> to vector<32x128xf32>
    %21 = arith.subf %20, %4 : vector<32x128xf32>
    %cst_4 = arith.constant 0.000000e+00 : f32
    %22 = vector.broadcast %cst_4 : f32 to vector<32x128xf32>
    %23 = arith.maximumf %21, %22 : vector<32x128xf32>
    %24 = vector.broadcast %13 : vector<32x1xf32> to vector<32x128xf32>
    %25 = arith.mulf %24, %23 : vector<32x128xf32>
    %26 = arith.minimumf %19, %25 : vector<32x128xf32>
    %c0_5 = arith.constant 0 : index
    %c0_6 = arith.constant 0 : index
    %27 = vector.load %arg3[%c0_5, %c0_6] : memref<32x128xf32, #tpu.memory_space<vmem>>, vector<32x128xf32>
    tpu.vector_store %arg3[%c0_5, %c0_6], %26 {strides = array<i32>} : memref<32x128xf32, #tpu.memory_space<vmem>>, vector<32x128xf32>,
    return
  }
  func.func @transform_0(%arg0: i32) -> (i32, i32) {
    %c0_i32 = arith.constant 0 : i32
    %c0_i32_0 = arith.constant 0 : i32
    return %c0_i32, %arg0 : i32, i32
  }
  func.func @transform_1(%arg0: i32) -> (i32, i32, i32) {
    %c0_i32 = arith.constant 0 : i32
    %c0_i32_0 = arith.constant 0 : i32
    %c0_i32_1 = arith.constant 0 : i32
    %c0_i32_2 = arith.constant 0 : i32
    return %c0_i32, %c0_i32_0, %c0_i32_1 : i32, i32, i32
  }
  func.func @transform_2(%arg0: i32) -> (i32, i32) {
    %c0_i32 = arith.constant 0 : i32
    %c0_i32_0 = arith.constant 0 : i32
    return %c0_i32, %arg0 : i32, i32
  }
}

</mosaic_0001>

<llo_original>
// kernel: tpu_custom_call.1
$region0: #{tpu_custom_call.1}
  #allocation0 [shape = 'u32[]', space=smem, size = 0x4, offset = 0x4, fixed_abs, tag = 'smem constant byte address 0x4 - core index']
  #allocation1 [shape = 'u32[144,128]{1,0:T(1,128)}', space=vmem, size = 0x12000, scoped, tag = 'internal scratch']
  %s0 = inlined_call_operand.vmem [shape: f32[4,128], index: 0, kind: input, shape index: {}]
  %s1 = inlined_call_operand.vmem [shape: f32[4,32,1], index: 1, kind: input, shape index: {}]
  %s2 = inlined_call_operand.hbm [shape: f32[32,128], index: 2, kind: output, shape index: {}]
  %s3 = sld [smem:[#allocation0]]
  $region18: #{tpu_custom_call.1} parent=0
    _
  %s5 = ssub.s32 1, %s3
  %s6 = scalar_select 0, %s5, %s3
  $region1: #{tpu_custom_call.1} parent=0
    #allocation2 [shape = 'u8[16384]{0}', space=vmem, size = 0x4000, scoped, tag = 'output window, operand 0, single buffered']
    #allocation3 [shape = 's32[1]{0}', space=sflag, size = 0x4, scoped, tag = 'scoped memory for tpu_custom_call.1']
    %7 = vsyncpa [#allocation3], 0
    // Predicated region
    $region2: #{tpu_custom_call.1} parent=1 // pred_check
      _
    $region3: #{tpu_custom_call.1} parent=1 // pred_check_branch
      %9 = sbr.rel (0) target = $region5
    $region4: #{tpu_custom_call.1} parent=1 // pred_region
      _
    $region5: #{tpu_custom_call.1} parent=1 // pred_fallthru
      _
    // Predicated region
    $region6: #{tpu_custom_call.1} parent=1 // pred_check
      _
    $region7: #{tpu_custom_call.1} parent=1 // pred_check_branch
      %11 = sbr.rel (0) target = $region9
    $region8: #{tpu_custom_call.1} parent=1 // pred_region
      _
    $region9: #{tpu_custom_call.1} parent=1 // pred_fallthru
      _
    %v12 = vld [vmem:[%s0] sm:$0xf]
    %v15 = vunpack.c.l.s4 1966171168
    %v16 = vunpack.c.0.s8 %v15
    %v17 = vlaneseq
    %v18 = vshrl.u32 %v17, 7
    %v19 = vsub.s32 %v16, %v18
    %v20 = vrot.slane %v12, %v19
    %v21 = vcombine.high %v20, %v20
    %v23 = vunpack.c.l.s4 1966171168
    %v24 = vunpack.c.0.s8 %v23
    %v25 = vlaneseq
    %v26 = vshrl.u32 %v25, 7
    %v27 = vsub.s32 %v24, %v26
    %v28 = vrot.slane %v20, %v27
    %v30 = vunpack.c.l.s4 1966171168
    %v31 = vunpack.c.0.s8 %v30
    %v32 = vlaneseq
    %v33 = vshrl.u32 %v32, 7
    %v34 = vsub.s32 %v31, %v33
    %v35 = vrot.slane %v21, %v34
    %v36 = vcombine.high %v28, %v28
    %v37 = vcombine.high %v35, %v35
    %v38 = vlaneseq
    %v39 = vshrl.u32 %v38, 7
    %v40 = vsub.s32 0, %v39
    %v41 = vrot.slane %v28, %v40
    %v42 = vlaneseq
    %v43 = vshrl.u32 %v42, 7
    %v44 = vsub.s32 0, %v43
    %v45 = vrot.slane %v35, %v44
    %v46 = vlaneseq
    %v47 = vshrl.u32 %v46, 7
    %v48 = vsub.s32 0, %v47
    %v49 = vrot.slane %v36, %v48
    %v50 = vlaneseq
    %v51 = vshrl.u32 %v50, 7
    %v52 = vsub.s32 0, %v51
    %v53 = vrot.slane %v37, %v52
    %v58 = vld [vmem:[%s1] sm:$0xff]
    %v59 = vld [vmem:[%s1 + $0x8] sm:$0xff]
    %v60 = vld [vmem:[%s1 + $0x10] sm:$0xff]
    %v61 = vld [vmem:[%s1 + $0x18] sm:$0xff]
    %v62 = vld [vmem:[%s1 + $0x20] sm:$0xff]
    %v63 = vld [vmem:[%s1 + $0x28] sm:$0xff]
    %v64 = vld [vmem:[%s1 + $0x30] sm:$0xff]
    %v65 = vld [vmem:[%s1 + $0x38] sm:$0xff]
    %v66 = vld [vmem:[%s1 + $0x40] sm:$0xff]
    %v67 = vld [vmem:[%s1 + $0x48] sm:$0xff]
    %v68 = vld [vmem:[%s1 + $0x50] sm:$0xff]
    %v69 = vld [vmem:[%s1 + $0x58] sm:$0xff]
    %v70 = vld [vmem:[%s1 + $0x60] sm:$0xff]
    %v71 = vld [vmem:[%s1 + $0x68] sm:$0xff]
    %v72 = vld [vmem:[%s1 + $0x70] sm:$0xff]
    %v73 = vld [vmem:[%s1 + $0x78] sm:$0xff]
    %75 = vset.pattern.permute.xlu0 0
    %76 = vperm.xlu0 %75, %v58
    %v77 = vpop.permute.xlu0 %76
    %80 = vset.pattern.permute.xlu0 0
    %81 = vperm.xlu0 %80, %v59
    %v82 = vpop.permute.xlu0 %81
    %85 = vset.pattern.permute.xlu0 0
    %86 = vperm.xlu0 %85, %v60
    %v87 = vpop.permute.xlu0 %86
    %90 = vset.pattern.permute.xlu0 0
    %91 = vperm.xlu0 %90, %v61
    %v92 = vpop.permute.xlu0 %91
    %v94 = vsub.f32 %v41, %v77
    %v95 = vsub.f32 %v45, %v82
    %v96 = vsub.f32 %v49, %v87
    %v97 = vsub.f32 %v53, %v92
    %v98 = vmax.f32 %v94, 0.0
    %v99 = vmax.f32 %v95, 0.0
    %v100 = vmax.f32 %v96, 0.0
    %v101 = vmax.f32 %v97, 0.0
    %103 = vset.pattern.permute.xlu0 0
    %104 = vperm.xlu0 %103, %v66
    %v105 = vpop.permute.xlu0 %104
    %108 = vset.pattern.permute.xlu0 0
    %109 = vperm.xlu0 %108, %v67
    %v110 = vpop.permute.xlu0 %109
    %113 = vset.pattern.permute.xlu0 0
    %114 = vperm.xlu0 %113, %v68
    %v115 = vpop.permute.xlu0 %114
    %118 = vset.pattern.permute.xlu0 0
    %119 = vperm.xlu0 %118, %v69
    %v120 = vpop.permute.xlu0 %119
    %v122 = vmul.f32 %v105, %v98
    %v123 = vmul.f32 %v110, %v99
    %v124 = vmul.f32 %v115, %v100
    %v125 = vmul.f32 %v120, %v101
    %127 = vset.pattern.permute.xlu0 0
    %128 = vperm.xlu0 %127, %v62
    %v129 = vpop.permute.xlu0 %128
    %132 = vset.pattern.permute.xlu0 0
    %133 = vperm.xlu0 %132, %v63
    %v134 = vpop.permute.xlu0 %133
    %137 = vset.pattern.permute.xlu0 0
    %138 = vperm.xlu0 %137, %v64
    %v139 = vpop.permute.xlu0 %138
    %142 = vset.pattern.permute.xlu0 0
    %143 = vperm.xlu0 %142, %v65
    %v144 = vpop.permute.xlu0 %143
    %v146 = vsub.f32 %v129, %v41
    %v147 = vsub.f32 %v134, %v45
    %v148 = vsub.f32 %v139, %v49
    %v149 = vsub.f32 %v144, %v53
    %v150 = vmax.f32 %v146, 0.0
    %v151 = vmax.f32 %v147, 0.0
    %v152 = vmax.f32 %v148, 0.0
    %v153 = vmax.f32 %v149, 0.0
    %155 = vset.pattern.permute.xlu0 0
    %156 = vperm.xlu0 %155, %v70
    %v157 = vpop.permute.xlu0 %156
    %160 = vset.pattern.permute.xlu0 0
    %161 = vperm.xlu0 %160, %v71
    %v162 = vpop.permute.xlu0 %161
    %165 = vset.pattern.permute.xlu0 0
    %166 = vperm.xlu0 %165, %v72
    %v167 = vpop.permute.xlu0 %166
    %170 = vset.pattern.permute.xlu0 0
    %171 = vperm.xlu0 %170, %v73
    %v172 = vpop.permute.xlu0 %171
    %v174 = vmul.f32 %v157, %v150
    %v175 = vmul.f32 %v162, %v151
    %v176 = vmul.f32 %v167, %v152
    %v177 = vmul.f32 %v172, %v153
    %v178 = vmin.f32 %v122, %v174
    %v179 = vmin.f32 %v123, %v175
    %v180 = vmin.f32 %v124, %v176
    %v181 = vmin.f32 %v125, %v177
    %182 = vst [vmem:[#allocation2] sm:$0xff] %v178
    %183 = vst [vmem:[#allocation2 + $0x8] sm:$0xff] %v179
    %184 = vst [vmem:[#allocation2 + $0x10] sm:$0xff] %v180
    %185 = vst [vmem:[#allocation2 + $0x18] sm:$0xff] %v181
    // Predicated region
    $region10: #{tpu_custom_call.1} parent=1 // pred_check
      _
    $region11: #{tpu_custom_call.1} parent=1 // pred_check_branch
      %187 = sbr.rel (0) target = $region13
    $region12: #{tpu_custom_call.1} parent=1 // pred_region
      %s189 = ssub.s32 512, 512
      %190 = vsyncadd [#allocation3], %s189
      %s191 = sshll.u32 [#allocation2], 4
      %s192 = int_to_ptr.vmem [resolvable:$true] %s191
      %197 = dma.vmem_to_hbm [thread:$0]  %s192, 512, %s2, [#allocation3], 128, 128, 8
    $region13: #{tpu_custom_call.1} parent=1 // pred_fallthru
      _
    // Predicated region
    $region14: #{tpu_custom_call.1} parent=1 // pred_check
      _
    $region15: #{tpu_custom_call.1} parent=1 // pred_check_branch
      %199 = sbr.rel (0) target = $region17
    $region16: #{tpu_custom_call.1} parent=1 // pred_region
      %200 = dma.done [#allocation3], 512
    $region17: #{tpu_custom_call.1} parent=1 // pred_fallthru
      _
    %201 = vsyncpa [#allocation3], 1

</llo_original>
